<compile_context>
chip_gen: v6e
topology: v6e:2x2x1
jax: 0.10.0
libtpu: 0.0.40
codegen_flags: <defaults>
</compile_context>

<pallas_src>
import functools

import jax
import jax.numpy as jnp
from jax import lax
from jax.experimental import pallas as pl
from jax.experimental.pallas import tpu as pltpu

_VMEM_LIMIT = 32 * 1024 * 1024  # well under v7x's 64 MiB physical VMEM; fine on v5e/v6e
_EPS_SQ = 1e-24                 # torch F.normalize eps=1e-12, applied on the squared norm


# ----------------------------------------------------------------------------
# Pallas kernels
# ----------------------------------------------------------------------------
def _conv_row_feat_kernel(x0_ref, x1_ref, x2_ref, w_ref, b_ref, y_ref, f_ref,
                          *, apply_relu):
    """One output row of a 3x3/stride-1/pad-1 conv + bias (+ReLU), with the feature
    tap (normalize over C -> running spatial max -> final normalize) fused in.

    x{0,1,2}: (1, 1, W+2, Cin) bf16 rows h, h+1, h+2 of the padded input
    w:        (3, 3, Cin, Cout) bf16      b: (1, Cout) f32
    y:        (1, 1, W, Cout)   bf16 activation row (written every step)
    f:        (1, 1, Cout)      f32 feature (resident across the H axis per batch)
    """
    h = pl.program_id(1)
    W = y_ref.shape[2]
    Cout = y_ref.shape[3]

    rows = (x0_ref[0, 0], x1_ref[0, 0], x2_ref[0, 0])   # each (W+2, Cin) bf16
    acc = jnp.zeros((W, Cout), jnp.float32)
    for dh in range(3):
        xrow = rows[dh]
        for dw in range(3):
            acc += jnp.dot(xrow[dw:dw + W, :], w_ref[dh, dw],
                           preferred_element_type=jnp.float32)

    out = acc + b_ref[...]                               # (W, Cout) f32
    if apply_relu:
        out = jnp.maximum(out, 0.0)
    y_ref[0, 0] = out.astype(y_ref.dtype)                # bf16 writeback

    # Fused feature tap (done on the f32 pre-cast activation).
    ssq = jnp.sum(out * out, axis=-1, keepdims=True)
    xn = out * lax.rsqrt(jnp.maximum(ssq, jnp.float32(_EPS_SQ)))
    m = jnp.max(xn, axis=0, keepdims=True)               # (1, Cout)

    @pl.when(h == 0)
    def _():
        f_ref[0] = m

    @pl.when(h != 0)
    def _():
        f_ref[0] = jnp.maximum(f_ref[0], m)

    @pl.when(h == pl.num_programs(1) - 1)
    def _():
        p = f_ref[0]
        psq = jnp.sum(p * p, axis=-1, keepdims=True)
        f_ref[0] = p * lax.rsqrt(jnp.maximum(psq, jnp.float32(_EPS_SQ)))


def _feat_kernel(x_ref, o_ref, *, HW, thw):
    """Standalone streaming tap: normalize(dim=C) -> global spatial max -> normalize.

    x: (1, thw, C) tile of the (B, H*W, C) activation.  o: (1, 1, C) resident output
    used directly as the running-max accumulator (no scratch).
    """
    s = pl.program_id(1)
    x = x_ref[0].astype(jnp.float32)                     # (thw, C)
    ssq = jnp.sum(x * x, axis=-1, keepdims=True)
    xn = x * lax.rsqrt(jnp.maximum(ssq, jnp.float32(_EPS_SQ)))
    # Mask rows past H*W (last block may be partial when thw does not divide H*W).
    idx = s * thw + lax.broadcasted_iota(jnp.int32, xn.shape, 0)
    xn = jnp.where(idx < HW, xn, -jnp.inf)
    m = jnp.max(xn, axis=0, keepdims=True)               # (1, C)

    @pl.when(s == 0)
    def _():
        o_ref[0] = m

    @pl.when(s != 0)
    def _():
        o_ref[0] = jnp.maximum(o_ref[0], m)

    @pl.when(s == pl.num_programs(1) - 1)
    def _():
        p = o_ref[0]
        psq = jnp.sum(p * p, axis=-1, keepdims=True)
        o_ref[0] = p * lax.rsqrt(jnp.maximum(psq, jnp.float32(_EPS_SQ)))


# ----------------------------------------------------------------------------
# Wrappers
# ----------------------------------------------------------------------------
def conv3x3_bias_relu_feat(x_nhwc, weight, bias, *, apply_relu=True):
    """Conv2d(k=3, s=1, p=1) + bias (+ReLU) with the fused feature tap.

    x: (B, H, W, Cin) NHWC (f32 or bf16); weight: (Cout, Cin, 3, 3); bias: (Cout,)
    Returns (activation (B,H,W,Cout) bf16, feature (B,Cout) f32).
    """
    B, H, W, Cin = x_nhwc.shape
    Cout = weight.shape[0]
    Wp2 = W + 2

    # Only wrapper glue: spatial zero-pad + bf16 cast of the input (already bf16 for
    # layers >= 2), and a one-time tiny weight transpose/cast.  No im2col, no M/N pad.
    xp = jnp.pad(x_nhwc, ((0, 0), (1, 1), (1, 1), (0, 0))).astype(jnp.bfloat16)
    wt = jnp.transpose(weight, (2, 3, 1, 0)).astype(jnp.bfloat16)   # (3,3,Cin,Cout)
    bp = bias.astype(jnp.float32).reshape(1, Cout)

    kernel = functools.partial(_conv_row_feat_kernel, apply_relu=apply_relu)
    y, feat = pl.pallas_call(
        kernel,
        out_shape=(jax.ShapeDtypeStruct((B, H, W, Cout), jnp.bfloat16),
                   jax.ShapeDtypeStruct((B, 1, Cout), jnp.float32)),
        grid_spec=pltpu.PrefetchScalarGridSpec(
            num_scalar_prefetch=0,
            grid=(B, H),
            in_specs=[
                # Three row-shifted views of the SAME padded array (block height 1 =>
                # block index == element row index) provide the 3x3 halo.
                pl.BlockSpec((1, 1, Wp2, Cin), lambda b, h: (b, h, 0, 0)),
                pl.BlockSpec((1, 1, Wp2, Cin), lambda b, h: (b, h + 1, 0, 0)),
                pl.BlockSpec((1, 1, Wp2, Cin), lambda b, h: (b, h + 2, 0, 0)),
                pl.BlockSpec((3, 3, Cin, Cout), lambda b, h: (0, 0, 0, 0)),  # resident
                pl.BlockSpec((1, Cout), lambda b, h: (0, 0)),                # resident
            ],
            out_specs=[
                pl.BlockSpec((1, 1, W, Cout), lambda b, h: (b, h, 0, 0)),
                pl.BlockSpec((1, 1, Cout), lambda b, h: (b, 0, 0)),          # accumulator
            ],
        ),
        compiler_params=pltpu.CompilerParams(
            dimension_semantics=("parallel", "arbitrary"),
            vmem_limit_bytes=_VMEM_LIMIT,
        ),
    )(xp, xp, xp, wt, bp)

    return y, feat[:, 0, :]


def extract_feature(x_nhwc, *, max_thw=512):
    """Standalone tap: normalize(dim=C) -> global spatial max pool -> normalize(dim=C).
    Returns (B, C) f32."""
    B, H, W, C = x_nhwc.shape
    HW = H * W
    x = x_nhwc.reshape(B, HW, C)

    thw = HW if HW <= max_thw else max_thw       # bounded tile; partial tail is masked
    n_s = pl.cdiv(HW, thw)

    out = pl.pallas_call(
        functools.partial(_feat_kernel, HW=HW, thw=thw),
        out_shape=jax.ShapeDtypeStruct((B, 1, C), jnp.float32),
        grid_spec=pltpu.PrefetchScalarGridSpec(
            num_scalar_prefetch=0,
            grid=(B, n_s),
            in_specs=[pl.BlockSpec((1, thw, C), lambda b, s: (b, s, 0))],
            out_specs=pl.BlockSpec((1, 1, C), lambda b, s: (b, 0, 0)),
        ),
        compiler_params=pltpu.CompilerParams(
            dimension_semantics=("parallel", "arbitrary"),
            vmem_limit_bytes=_VMEM_LIMIT,
        ),
    )(x)
    return out[:, 0, :]


# ----------------------------------------------------------------------------
# featExtractor equivalent
# ----------------------------------------------------------------------------
class FeatExtractor:
    """Mirrors featExtractor.forward: run submodules in order, tap named layers.

    Modules may return either an activation, or (activation, fused_feature); when a
    tapped module already fused the tap into its epilogue, its feature is used
    directly, otherwise the standalone extract_feature kernel is applied.
    """

    def __init__(self, named_modules, layer_name):
        self.named_modules = named_modules   # list of (name, callable), NHWC activations
        self.featLayer = layer_name

    def __call__(self, x):
        logits = x
        tensors = []
        for nm, module in self.named_modules:
            out = module(logits)
            if isinstance(out, tuple):
                logits, fused_feat = out
            else:
                logits, fused_feat = out, None
            if nm in self.featLayer:
                feat = fused_feat if fused_feat is not None else extract_feature(logits)
                tensors.append(feat)
        out = jnp.concatenate(tensors, axis=1).reshape(logits.shape[0], -1)
        # TODO(synk): original forward prints logits.shape (host-side side effect only).
        return out


# ----------------------------------------------------------------------------
# Pure-JAX reference (same bf16 operand casts / bf16 inter-layer activations)
# ----------------------------------------------------------------------------
def _conv_ref(x_bf16, w, b):
    B, H, W, Cin = x_bf16.shape
    Cout = w.shape[0]
    xp = jnp.pad(x_bf16.astype(jnp.bfloat16), ((0, 0), (1, 1), (1, 1), (0, 0)))
    wt = jnp.transpose(w, (2, 3, 1, 0)).astype(jnp.bfloat16)   # (3,3,Cin,Cout)
    acc = jnp.zeros((B, H, W, Cout), jnp.float32)
    for dh in range(3):
        for dw in range(3):
            acc += jnp.einsum('bhwc,cf->bhwf', xp[:, dh:dh + H, dw:dw + W, :],
                              wt[dh, dw], preferred_element_type=jnp.float32)
    out = acc + b.astype(jnp.float32)[None, None, None, :]
    return jnp.maximum(out, 0.0)          # f32 activation


def _feat_ref(x_f32):
    B, H, W, C = x_f32.shape
    xf = x_f32.reshape(B, H * W, C)
    n = jnp.sqrt(jnp.sum(xf * xf, axis=-1, keepdims=True))
    xn = xf / jnp.maximum(n, 1e-12)
    p = jnp.max(xn, axis=1)
    pn = jnp.sqrt(jnp.sum(p * p, axis=-1, keepdims=True))
    return p / jnp.maximum(pn, 1e-12)


def _reference_forward(x_nhwc, layers):
    feats = []
    act = x_nhwc
    for w, b in layers:
        a32 = _conv_ref(act, w, b)
        feats.append(_feat_ref(a32))
        act = a32.astype(jnp.bfloat16)    # matches bf16 activation writeback
    return jnp.concatenate(feats, axis=1)


# ----------------------------------------------------------------------------
# Main
# ----------------------------------------------------------------------------
if __name__ == "__main__":
    key = jax.random.PRNGKey(0)
    k_x, k_w1, k_b1, k_w2, k_b2 = jax.random.split(key, 5)

    B, Cin, H, W = 2, 4, 16, 16
    C1, C2 = 8, 16

    x_nchw = jax.random.normal(k_x, (B, Cin, H, W), jnp.float32)
    w1 = jax.random.normal(k_w1, (C1, Cin, 3, 3), jnp.float32) * 0.1
    b1 = jax.random.normal(k_b1, (C1,), jnp.float32) * 0.1
    w2 = jax.random.normal(k_w2, (C2, C1, 3, 3), jnp.float32) * 0.1
    b2 = jax.random.normal(k_b2, (C2,), jnp.float32) * 0.1

    # One-time layout conversion; everything downstream is channels-last (NHWC).
    x = jnp.transpose(x_nchw, (0, 2, 3, 1))

    # Synthetic backbone: conv+relu blocks with the feature tap fused into each
    # block's epilogue (taps after each ReLU, matching conv -> relu -> tap semantics).
    named_modules = [
        ("block1", lambda t: conv3x3_bias_relu_feat(t, w1, b1)),
        ("block2", lambda t: conv3x3_bias_relu_feat(t, w2, b2)),
    ]
    fe = FeatExtractor(named_modules, layer_name=["block1", "block2"])

    out = fe(x)
    jax.block_until_ready(out)

    ref = _reference_forward(x, [(w1, b1), (w2, b2)])

    assert out.shape == (B, C1 + C2), out.shape
    assert bool(jnp.all(jnp.isfinite(out)))
    assert bool(jnp.allclose(out, ref, atol=1e-2, rtol=1e-2)), \
        float(jnp.max(jnp.abs(out - ref)))

    # Cross-check: standalone streaming tap kernel vs the fused epilogue tap
    # (standalone runs on the bf16 activation, so tolerance covers bf16 rounding).
    y1, f1 = conv3x3_bias_relu_feat(x, w1, b1)
    f1_alone = extract_feature(y1)
    jax.block_until_ready(f1_alone)
    assert bool(jnp.allclose(f1_alone, f1, atol=2e-2, rtol=2e-2)), \
        float(jnp.max(jnp.abs(f1_alone - f1)))

    print("KERNEL_OK")
</pallas_src>

<mosaic_0001>
module attributes {stable_mosaic.version = 11 : i64} {
  func.func @_conv_row_feat_kernel(%arg0: i32, %arg1: i32, %arg2: memref<1x1x18x4xbf16, #tpu.memory_space<vmem>>, %arg3: memref<1x1x18x4xbf16, #tpu.memory_space<vmem>>, %arg4: memref<1x1x18x4xbf16, #tpu.memory_space<vmem>>, %arg5: memref<3x3x4x8xbf16, #tpu.memory_space<vmem>>, %arg6: memref<1x8xf32, #tpu.memory_space<vmem>>, %arg7: memref<1x1x16x8xbf16, #tpu.memory_space<vmem>>, %arg8: memref<1x1x8xf32, #tpu.memory_space<vmem>>) attributes {dimension_semantics = [#tpu.dimension_semantics<parallel>, #tpu.dimension_semantics<arbitrary>], iteration_bounds = array<i64: 2, 16>, scalar_prefetch = 0 : i64, scratch_operands = 0 : i64, tpu.core_type = #tpu.core_type<tc>, window_params = [{transform_indices = @transform_0, window_bounds = array<i64: 1, 1, 18, 4>}, {transform_indices = @transform_1, window_bounds = array<i64: 1, 1, 18, 4>}, {transform_indices = @transform_2, window_bounds = array<i64: 1, 1, 18, 4>}, {pipeline_mode = #tpu.pipeline_mode<synchronous>, transform_indices = @transform_3, window_bounds = array<i64: 3, 3, 4, 8>}, {pipeline_mode = #tpu.pipeline_mode<synchronous>, transform_indices = @transform_4, window_bounds = array<i64: 1, 8>}, {transform_indices = @transform_5, window_bounds = array<i64: 1, 1, 16, 8>}, {transform_indices = @transform_6, window_bounds = array<i64: 1, 1, 8>}]} {
    %c0 = arith.constant 0 : index
    %c0_0 = arith.constant 0 : index
    %c0_1 = arith.constant 0 : index
    %c0_2 = arith.constant 0 : index
    %0 = vector.load %arg2[%c0, %c0_0, %c0_1, %c0_2] : memref<1x1x18x4xbf16, #tpu.memory_space<vmem>>, vector<1x1x18x4xbf16>
    %1 = vector.shape_cast %0 : vector<1x1x18x4xbf16> to vector<18x4xbf16>
    %c0_3 = arith.constant 0 : index
    %c0_4 = arith.constant 0 : index
    %c0_5 = arith.constant 0 : index
    %c0_6 = arith.constant 0 : index
    %2 = vector.load %arg3[%c0_3, %c0_4, %c0_5, %c0_6] : memref<1x1x18x4xbf16, #tpu.memory_space<vmem>>, vector<1x1x18x4xbf16>
    %3 = vector.shape_cast %2 : vector<1x1x18x4xbf16> to vector<18x4xbf16>
    %c0_7 = arith.constant 0 : index
    %c0_8 = arith.constant 0 : index
    %c0_9 = arith.constant 0 : index
    %c0_10 = arith.constant 0 : index
    %4 = vector.load %arg4[%c0_7, %c0_8, %c0_9, %c0_10] : memref<1x1x18x4xbf16, #tpu.memory_space<vmem>>, vector<1x1x18x4xbf16>
    %5 = vector.shape_cast %4 : vector<1x1x18x4xbf16> to vector<18x4xbf16>
    %cst = arith.constant 0.000000e+00 : f32
    %6 = vector.broadcast %cst : f32 to vector<16x8xf32>
    %7 = vector.extract_strided_slice %1 {offsets = [0, 0], sizes = [16, 4], strides = [1, 1]} : vector<18x4xbf16> to vector<16x4xbf16>
    %c0_11 = arith.constant 0 : index
    %c0_12 = arith.constant 0 : index
    %c0_13 = arith.constant 0 : index
    %c0_14 = arith.constant 0 : index
    %8 = vector.load %arg5[%c0_11, %c0_12, %c0_13, %c0_14] : memref<3x3x4x8xbf16, #tpu.memory_space<vmem>>, vector<1x1x4x8xbf16>
    %9 = vector.shape_cast %8 : vector<1x1x4x8xbf16> to vector<4x8xbf16>
    %cst_15 = arith.constant dense<0.000000e+00> : vector<16x8xf32>
    %10 = tpu.matmul %7, %9, %cst_15 {dimension_numbers = #tpu.dot_dimension_numbers<[1], [0], [0], [1], [0, 0, 1, 1], [], []>} : vector<16x4xbf16>, vector<4x8xbf16>, vector<16x8xf32> -> vector<16x8xf32>
    %11 = arith.addf %6, %10 : vector<16x8xf32>
    %12 = vector.extract_strided_slice %1 {offsets = [1, 0], sizes = [16, 4], strides = [1, 1]} : vector<18x4xbf16> to vector<16x4xbf16>
    %c0_16 = arith.constant 0 : index
    %c1 = arith.constant 1 : index
    %c0_17 = arith.constant 0 : index
    %c0_18 = arith.constant 0 : index
    %13 = vector.load %arg5[%c0_16, %c1, %c0_17, %c0_18] : memref<3x3x4x8xbf16, #tpu.memory_space<vmem>>, vector<1x1x4x8xbf16>
    %14 = vector.shape_cast %13 : vector<1x1x4x8xbf16> to vector<4x8xbf16>
    %cst_19 = arith.constant dense<0.000000e+00> : vector<16x8xf32>
    %15 = tpu.matmul %12, %14, %cst_19 {dimension_numbers = #tpu.dot_dimension_numbers<[1], [0], [0], [1], [0, 0, 1, 1], [], []>} : vector<16x4xbf16>, vector<4x8xbf16>, vector<16x8xf32> -> vector<16x8xf32>
    %16 = arith.addf %11, %15 : vector<16x8xf32>
    %17 = vector.extract_strided_slice %1 {offsets = [2, 0], sizes = [16, 4], strides = [1, 1]} : vector<18x4xbf16> to vector<16x4xbf16>
    %c0_20 = arith.constant 0 : index
    %c2 = arith.constant 2 : index
    %c0_21 = arith.constant 0 : index
    %c0_22 = arith.constant 0 : index
    %18 = vector.load %arg5[%c0_20, %c2, %c0_21, %c0_22] : memref<3x3x4x8xbf16, #tpu.memory_space<vmem>>, vector<1x1x4x8xbf16>
    %19 = vector.shape_cast %18 : vector<1x1x4x8xbf16> to vector<4x8xbf16>
    %cst_23 = arith.constant dense<0.000000e+00> : vector<16x8xf32>
    %20 = tpu.matmul %17, %19, %cst_23 {dimension_numbers = #tpu.dot_dimension_numbers<[1], [0], [0], [1], [0, 0, 1, 1], [], []>} : vector<16x4xbf16>, vector<4x8xbf16>, vector<16x8xf32> -> vector<16x8xf32>
    %21 = arith.addf %16, %20 : vector<16x8xf32>
    %22 = vector.extract_strided_slice %3 {offsets = [0, 0], sizes = [16, 4], strides = [1, 1]} : vector<18x4xbf16> to vector<16x4xbf16>
    %c1_24 = arith.constant 1 : index
    %c0_25 = arith.constant 0 : index
    %c0_26 = arith.constant 0 : index
    %c0_27 = arith.constant 0 : index
    %23 = vector.load %arg5[%c1_24, %c0_25, %c0_26, %c0_27] : memref<3x3x4x8xbf16, #tpu.memory_space<vmem>>, vector<1x1x4x8xbf16>
    %24 = vector.shape_cast %23 : vector<1x1x4x8xbf16> to vector<4x8xbf16>
    %cst_28 = arith.constant dense<0.000000e+00> : vector<16x8xf32>
    %25 = tpu.matmul %22, %24, %cst_28 {dimension_numbers = #tpu.dot_dimension_numbers<[1], [0], [0], [1], [0, 0, 1, 1], [], []>} : vector<16x4xbf16>, vector<4x8xbf16>, vector<16x8xf32> -> vector<16x8xf32>
    %26 = arith.addf %21, %25 : vector<16x8xf32>
    %27 = vector.extract_strided_slice %3 {offsets = [1, 0], sizes = [16, 4], strides = [1, 1]} : vector<18x4xbf16> to vector<16x4xbf16>
    %c1_29 = arith.constant 1 : index
    %c1_30 = arith.constant 1 : index
    %c0_31 = arith.constant 0 : index
    %c0_32 = arith.constant 0 : index
    %28 = vector.load %arg5[%c1_29, %c1_30, %c0_31, %c0_32] : memref<3x3x4x8xbf16, #tpu.memory_space<vmem>>, vector<1x1x4x8xbf16>
    %29 = vector.shape_cast %28 : vector<1x1x4x8xbf16> to vector<4x8xbf16>
    %cst_33 = arith.constant dense<0.000000e+00> : vector<16x8xf32>
    %30 = tpu.matmul %27, %29, %cst_33 {dimension_numbers = #tpu.dot_dimension_numbers<[1], [0], [0], [1], [0, 0, 1, 1], [], []>} : vector<16x4xbf16>, vector<4x8xbf16>, vector<16x8xf32> -> vector<16x8xf32>
    %31 = arith.addf %26, %30 : vector<16x8xf32>
    %32 = vector.extract_strided_slice %3 {offsets = [2, 0], sizes = [16, 4], strides = [1, 1]} : vector<18x4xbf16> to vector<16x4xbf16>
    %c1_34 = arith.constant 1 : index
    %c2_35 = arith.constant 2 : index
    %c0_36 = arith.constant 0 : index
    %c0_37 = arith.constant 0 : index
    %33 = vector.load %arg5[%c1_34, %c2_35, %c0_36, %c0_37] : memref<3x3x4x8xbf16, #tpu.memory_space<vmem>>, vector<1x1x4x8xbf16>
    %34 = vector.shape_cast %33 : vector<1x1x4x8xbf16> to vector<4x8xbf16>
    %cst_38 = arith.constant dense<0.000000e+00> : vector<16x8xf32>
    %35 = tpu.matmul %32, %34, %cst_38 {dimension_numbers = #tpu.dot_dimension_numbers<[1], [0], [0], [1], [0, 0, 1, 1], [], []>} : vector<16x4xbf16>, vector<4x8xbf16>, vector<16x8xf32> -> vector<16x8xf32>
    %36 = arith.addf %31, %35 : vector<16x8xf32>
    %37 = vector.extract_strided_slice %5 {offsets = [0, 0], sizes = [16, 4], strides = [1, 1]} : vector<18x4xbf16> to vector<16x4xbf16>
    %c2_39 = arith.constant 2 : index
    %c0_40 = arith.constant 0 : index
    %c0_41 = arith.constant 0 : index
    %c0_42 = arith.constant 0 : index
    %38 = vector.load %arg5[%c2_39, %c0_40, %c0_41, %c0_42] : memref<3x3x4x8xbf16, #tpu.memory_space<vmem>>, vector<1x1x4x8xbf16>
    %39 = vector.shape_cast %38 : vector<1x1x4x8xbf16> to vector<4x8xbf16>
    %cst_43 = arith.constant dense<0.000000e+00> : vector<16x8xf32>
    %40 = tpu.matmul %37, %39, %cst_43 {dimension_numbers = #tpu.dot_dimension_numbers<[1], [0], [0], [1], [0, 0, 1, 1], [], []>} : vector<16x4xbf16>, vector<4x8xbf16>, vector<16x8xf32> -> vector<16x8xf32>
    %41 = arith.addf %36, %40 : vector<16x8xf32>
    %42 = vector.extract_strided_slice %5 {offsets = [1, 0], sizes = [16, 4], strides = [1, 1]} : vector<18x4xbf16> to vector<16x4xbf16>
    %c2_44 = arith.constant 2 : index
    %c1_45 = arith.constant 1 : index
    %c0_46 = arith.constant 0 : index
    %c0_47 = arith.constant 0 : index
    %43 = vector.load %arg5[%c2_44, %c1_45, %c0_46, %c0_47] : memref<3x3x4x8xbf16, #tpu.memory_space<vmem>>, vector<1x1x4x8xbf16>
    %44 = vector.shape_cast %43 : vector<1x1x4x8xbf16> to vector<4x8xbf16>
    %cst_48 = arith.constant dense<0.000000e+00> : vector<16x8xf32>
    %45 = tpu.matmul %42, %44, %cst_48 {dimension_numbers = #tpu.dot_dimension_numbers<[1], [0], [0], [1], [0, 0, 1, 1], [], []>} : vector<16x4xbf16>, vector<4x8xbf16>, vector<16x8xf32> -> vector<16x8xf32>
    %46 = arith.addf %41, %45 : vector<16x8xf32>
    %47 = vector.extract_strided_slice %5 {offsets = [2, 0], sizes = [16, 4], strides = [1, 1]} : vector<18x4xbf16> to vector<16x4xbf16>
    %c2_49 = arith.constant 2 : index
    %c2_50 = arith.constant 2 : index
    %c0_51 = arith.constant 0 : index
    %c0_52 = arith.constant 0 : index
    %48 = vector.load %arg5[%c2_49, %c2_50, %c0_51, %c0_52] : memref<3x3x4x8xbf16, #tpu.memory_space<vmem>>, vector<1x1x4x8xbf16>
    %49 = vector.shape_cast %48 : vector<1x1x4x8xbf16> to vector<4x8xbf16>
    %cst_53 = arith.constant dense<0.000000e+00> : vector<16x8xf32>
    %50 = tpu.matmul %47, %49, %cst_53 {dimension_numbers = #tpu.dot_dimension_numbers<[1], [0], [0], [1], [0, 0, 1, 1], [], []>} : vector<16x4xbf16>, vector<4x8xbf16>, vector<16x8xf32> -> vector<16x8xf32>
    %51 = arith.addf %46, %50 : vector<16x8xf32>
    %c0_54 = arith.constant 0 : index
    %c0_55 = arith.constant 0 : index
    %52 = vector.load %arg6[%c0_54, %c0_55] : memref<1x8xf32, #tpu.memory_space<vmem>>, vector<1x8xf32>
    %53 = vector.broadcast %52 : vector<1x8xf32> to vector<16x8xf32>
    %54 = arith.addf %51, %53 : vector<16x8xf32>
    %cst_56 = arith.constant 0.000000e+00 : f32
    %55 = vector.broadcast %cst_56 : f32 to vector<16x8xf32>
    %56 = arith.maximumf %54, %55 : vector<16x8xf32>
    %57 = arith.truncf %56 : vector<16x8xf32> to vector<16x8xbf16>
    %c0_57 = arith.constant 0 : index
    %c0_58 = arith.constant 0 : index
    %c0_59 = arith.constant 0 : index
    %c0_60 = arith.constant 0 : index
    %58 = vector.load %arg7[%c0_57, %c0_58, %c0_59, %c0_60] : memref<1x1x16x8xbf16, #tpu.memory_space<vmem>>, vector<1x1x16x8xbf16>
    %59 = vector.shape_cast %58 : vector<1x1x16x8xbf16> to vector<16x8xbf16>
    %60 = vector.shape_cast %57 : vector<16x8xbf16> to vector<1x1x16x8xbf16>
    tpu.vector_store %arg7[%c0_57, %c0_58, %c0_59, %c0_60], %60 {strides = array<i32>} : memref<1x1x16x8xbf16, #tpu.memory_space<vmem>>, vector<1x1x16x8xbf16>,
    %61 = arith.mulf %56, %56 : vector<16x8xf32>
    %cst_61 = arith.constant dense<0.000000e+00> : vector<16xf32>
    %62 = vector.multi_reduction <add>, %61, %cst_61 [1] : vector<16x8xf32> to vector<16xf32>
    %63 = vector.shape_cast %62 : vector<16xf32> to vector<16x1xf32>
    %cst_62 = arith.constant 1.000000e-24 : f32
    %64 = vector.broadcast %cst_62 : f32 to vector<16x1xf32>
    %65 = arith.maximumf %63, %64 : vector<16x1xf32>
    %66 = math.rsqrt %65 : vector<16x1xf32>
    %67 = vector.broadcast %66 : vector<16x1xf32> to vector<16x8xf32>
    %68 = arith.mulf %56, %67 : vector<16x8xf32>
    %cst_63 = arith.constant dense<0xFF800000> : vector<8xf32>
    %69 = vector.multi_reduction <maximumf>, %68, %cst_63 [0] : vector<16x8xf32> to vector<8xf32>
    %70 = vector.shape_cast %69 : vector<8xf32> to vector<1x8xf32>
    %c0_i32 = arith.constant 0 : i32
    %71 = arith.cmpi eq, %arg1, %c0_i32 : i32
    %72 = arith.extui %71 : i1 to i32
    %c0_i32_64 = arith.constant 0 : i32
    %73 = arith.cmpi ne, %72, %c0_i32_64 : i32
    scf.if %73 {
      %c0_68 = arith.constant 0 : index
      %c0_69 = arith.constant 0 : index
      %c0_70 = arith.constant 0 : index
      %80 = vector.load %arg8[%c0_68, %c0_69, %c0_70] : memref<1x1x8xf32, #tpu.memory_space<vmem>>, vector<1x1x8xf32>
      %81 = vector.shape_cast %80 : vector<1x1x8xf32> to vector<1x8xf32>
      %82 = vector.shape_cast %70 : vector<1x8xf32> to vector<1x1x8xf32>
      tpu.vector_store %arg8[%c0_68, %c0_69, %c0_70], %82 {strides = array<i32>} : memref<1x1x8xf32, #tpu.memory_space<vmem>>, vector<1x1x8xf32>,
    } else {
    }
    %c0_i32_65 = arith.constant 0 : i32
    %74 = arith.cmpi ne, %arg1, %c0_i32_65 : i32
    %75 = arith.extui %74 : i1 to i32
    %c0_i32_66 = arith.constant 0 : i32
    %76 = arith.cmpi ne, %75, %c0_i32_66 : i32
    scf.if %76 {
      %c0_68 = arith.constant 0 : index
      %c0_69 = arith.constant 0 : index
      %c0_70 = arith.constant 0 : index
      %80 = vector.load %arg8[%c0_68, %c0_69, %c0_70] : memref<1x1x8xf32, #tpu.memory_space<vmem>>, vector<1x1x8xf32>
      %81 = vector.shape_cast %80 : vector<1x1x8xf32> to vector<1x8xf32>
      %82 = arith.maximumf %81, %70 : vector<1x8xf32>
      %c0_71 = arith.constant 0 : index
      %c0_72 = arith.constant 0 : index
      %c0_73 = arith.constant 0 : index
      %83 = vector.load %arg8[%c0_71, %c0_72, %c0_73] : memref<1x1x8xf32, #tpu.memory_space<vmem>>, vector<1x1x8xf32>
      %84 = vector.shape_cast %83 : vector<1x1x8xf32> to vector<1x8xf32>
      %85 = vector.shape_cast %82 : vector<1x8xf32> to vector<1x1x8xf32>
      tpu.vector_store %arg8[%c0_71, %c0_72, %c0_73], %85 {strides = array<i32>} : memref<1x1x8xf32, #tpu.memory_space<vmem>>, vector<1x1x8xf32>,
    } else {
    }
    %c15_i32 = arith.constant 15 : i32
    %77 = arith.cmpi eq, %arg1, %c15_i32 : i32
    %78 = arith.extui %77 : i1 to i32
    %c0_i32_67 = arith.constant 0 : i32
    %79 = arith.cmpi ne, %78, %c0_i32_67 : i32
    scf.if %79 {
      %c0_68 = arith.constant 0 : index
      %c0_69 = arith.constant 0 : index
      %c0_70 = arith.constant 0 : index
      %80 = vector.load %arg8[%c0_68, %c0_69, %c0_70] : memref<1x1x8xf32, #tpu.memory_space<vmem>>, vector<1x1x8xf32>
      %81 = vector.shape_cast %80 : vector<1x1x8xf32> to vector<1x8xf32>
      %82 = arith.mulf %81, %81 : vector<1x8xf32>
      %cst_71 = arith.constant dense<0.000000e+00> : vector<1xf32>
      %83 = vector.multi_reduction <add>, %82, %cst_71 [1] : vector<1x8xf32> to vector<1xf32>
      %84 = vector.shape_cast %83 : vector<1xf32> to vector<1x1xf32>
      %cst_72 = arith.constant 1.000000e-24 : f32
      %85 = vector.broadcast %cst_72 : f32 to vector<1x1xf32>
      %86 = arith.maximumf %84, %85 : vector<1x1xf32>
      %87 = math.rsqrt %86 : vector<1x1xf32>
      %88 = vector.broadcast %87 : vector<1x1xf32> to vector<1x8xf32>
      %89 = arith.mulf %81, %88 : vector<1x8xf32>
      %c0_73 = arith.constant 0 : index
      %c0_74 = arith.constant 0 : index
      %c0_75 = arith.constant 0 : index
      %90 = vector.load %arg8[%c0_73, %c0_74, %c0_75] : memref<1x1x8xf32, #tpu.memory_space<vmem>>, vector<1x1x8xf32>
      %91 = vector.shape_cast %90 : vector<1x1x8xf32> to vector<1x8xf32>
      %92 = vector.shape_cast %89 : vector<1x8xf32> to vector<1x1x8xf32>
      tpu.vector_store %arg8[%c0_73, %c0_74, %c0_75], %92 {strides = array<i32>} : memref<1x1x8xf32, #tpu.memory_space<vmem>>, vector<1x1x8xf32>,
    } else {
    }
    return
  }
  func.func @transform_0(%arg0: i32, %arg1: i32) -> (i32, i32, i32, i32) {
    %c0_i32 = arith.constant 0 : i32
    %c0_i32_0 = arith.constant 0 : i32
    %c0_i32_1 = arith.constant 0 : i32
    return %arg0, %arg1, %c0_i32, %c0_i32_0 : i32, i32, i32, i32
  }
  func.func @transform_1(%arg0: i32, %arg1: i32) -> (i32, i32, i32, i32) {
    %c1_i32 = arith.constant 1 : i32
    %0 = arith.addi %arg1, %c1_i32 : i32
    %c0_i32 = arith.constant 0 : i32
    %c0_i32_0 = arith.constant 0 : i32
    %c0_i32_1 = arith.constant 0 : i32
    return %arg0, %0, %c0_i32, %c0_i32_0 : i32, i32, i32, i32
  }
  func.func @transform_2(%arg0: i32, %arg1: i32) -> (i32, i32, i32, i32) {
    %c2_i32 = arith.constant 2 : i32
    %0 = arith.addi %arg1, %c2_i32 : i32
    %c0_i32 = arith.constant 0 : i32
    %c0_i32_0 = arith.constant 0 : i32
    %c0_i32_1 = arith.constant 0 : i32
    return %arg0, %0, %c0_i32, %c0_i32_0 : i32, i32, i32, i32
  }
  func.func @transform_3(%arg0: i32, %arg1: i32) -> (i32, i32, i32, i32) {
    %c0_i32 = arith.constant 0 : i32
    %c0_i32_0 = arith.constant 0 : i32
    %c0_i32_1 = arith.constant 0 : i32
    %c0_i32_2 = arith.constant 0 : i32
    %c0_i32_3 = arith.constant 0 : i32
    return %c0_i32, %c0_i32_0, %c0_i32_1, %c0_i32_2 : i32, i32, i32, i32
  }
  func.func @transform_4(%arg0: i32, %arg1: i32) -> (i32, i32) {
    %c0_i32 = arith.constant 0 : i32
    %c0_i32_0 = arith.constant 0 : i32
    %c0_i32_1 = arith.constant 0 : i32
    return %c0_i32, %c0_i32_0 : i32, i32
  }
  func.func @transform_5(%arg0: i32, %arg1: i32) -> (i32, i32, i32, i32) {
    %c0_i32 = arith.constant 0 : i32
    %c0_i32_0 = arith.constant 0 : i32
    %c0_i32_1 = arith.constant 0 : i32
    return %arg0, %arg1, %c0_i32, %c0_i32_0 : i32, i32, i32, i32
  }
  func.func @transform_6(%arg0: i32, %arg1: i32) -> (i32, i32, i32) {
    %c0_i32 = arith.constant 0 : i32
    %c0_i32_0 = arith.constant 0 : i32
    %c0_i32_1 = arith.constant 0 : i32
    return %arg0, %c0_i32, %c0_i32_0 : i32, i32, i32
  }
}

</mosaic_0001>

<llo_original>
// kernel: tpu_custom_call.1
$region0: #{tpu_custom_call.1}
  #allocation0 [shape = 'u32[]', space=smem, size = 0x4, offset = 0x4, fixed_abs, tag = 'smem constant byte address 0x4 - core index']
  #allocation1 [shape = 'u32[144,128]{1,0:T(1,128)}', space=vmem, size = 0x12000, scoped, tag = 'internal scratch']
  %s0 = inlined_call_operand.vmem [shape: bf16[2,18,18,4], index: 0, kind: input, shape index: {}]
  %s1 = inlined_call_operand.vmem [shape: bf16[2,18,18,4], index: 1, kind: input, shape index: {}]
  %s2 = inlined_call_operand.vmem [shape: bf16[2,18,18,4], index: 2, kind: input, shape index: {}]
  %s3 = inlined_call_operand.vmem [shape: bf16[3,3,4,8], index: 3, kind: input, shape index: {}]
  %s4 = inlined_call_operand.vmem [shape: f32[1,8], index: 4, kind: input, shape index: {}]
  %s5 = inlined_call_operand.vmem [shape: bf16[2,16,16,8], index: 5, kind: output, shape index: {0}]
  %s6 = inlined_call_operand.hbm [shape: f32[2,1,8], index: 6, kind: output, shape index: {1}]
  %7 = xla_tuple %s5, %s6
  %s8 = sld [smem:[#allocation0]]
  $region73: #{tpu_custom_call.1} parent=0
    _
  %s10 = ssub.s32 1, %s8
  %s11 = scalar_select 0, %s10, %s8
  $region1: #{tpu_custom_call.1} parent=0
    #allocation2 [shape = 'u8[1024]{0}', space=vmem, size = 0x400, scoped, tag = 'output window, operand 1']
    #allocation3 [shape = 's32[2]{0}', space=sflag, size = 0x8, scoped, tag = 'scoped memory for tpu_custom_call.1']
    %12 = vsyncpa [#allocation3], 0
    %s13 = scalar_lea.sflag [#allocation3], 1
    %14 = vsyncpa %s13, 0
    loop: start=0, step=1, limit=34
    $region2: #{tpu_custom_call.1} parent=1 // loop_pre_header
      _
    $region3: #{tpu_custom_call.1} parent=1 // loop_header
      %s16 = sphi 0, %s20
      %p17 = scmp.ge.s32.totalorder %s16, 34
      %s23 = sphi 0, %s35
      %s24 = sphi 0, %s31
      %s25 = sphi 0, %s23
      %s26 = sphi 0, %s24
      %s27 = sphi 0, %s25
      %s28 = sphi 0, %s26
      %s40 = sphi 0, %s42
      %s43 = sphi 0, %s40
      %s44 = sphi 0, %s43
      %s60 = sphi 0, %s44
      %s70 = sphi 0, %s72
      %s73 = sphi 0, %s70
      %s74 = sphi 0, %s73
      %s90 = sphi 0, %s74
      %s100 = sphi 0, %s102
      %s103 = sphi 0, %s100
      %s104 = sphi 0, %s103
      %s120 = sphi 0, %s104
      %s124 = sphi 0, %s124
      %s126 = sphi 0, %s124
      %s127 = sphi 0, %s126
      %s141 = sphi 0, %s127
      %s145 = sphi 0, %s145
      %s147 = sphi 0, %s145
      %s148 = sphi 0, %s147
      %s162 = sphi 0, %s148
      %s170 = sphi 0, %s172
      %s173 = sphi 0, %s170
      %s174 = sphi 0, %s173
      %s190 = sphi 0, %s174
      %s196 = sphi 0, %s198
      %s199 = sphi 0, %s196
      %s200 = sphi 0, %s199
      %s216 = sphi 0, %s200
    $region4: #{tpu_custom_call.1} parent=1 // loop_header_branch
      %19 = sbr.rel (%p17) target = $region8
    $region5: #{tpu_custom_call.1} parent=1 // loop_body
      %s21 = ssub.s32 %s16, 1
      %s22 = ssub.s32 %s16, 2
      %s29 = sadd.s32 1, %s24
      %p30 = scmp.ge.s32.totalorder %s29, 16
      %s31 = scalar_select %p30, 0, %s29
      %s32 = sadd.s32 1, %s23
      %s33 = scalar_select %p30, %s32, %s23
      %p34 = scmp.ge.s32.totalorder %s33, 2
      %s35 = scalar_select %p34, 0, %s33
      %s36 = ssub.s32 %s23, %s35
      %s37 = ssub.s32 %s24, %s31
      %s38 = sor.u32 %s36, %s37
      %p39 = scmp.eq.s32.totalorder %s38, 0
      %s41 = sadd.s32 %s40, 1
      %s42 = scalar_select %p39, %s40, %s41
      %p45 = pneg %p39
      %p46 = scmp.eq.s32.totalorder %s16, 31
      %p47 = por %p45, %p46
      %p48 = scmp.ne.s32.totalorder %s40, %s43
      %p49 = scmp.eq.s32.totalorder %s16, 0
      %p50 = por %p48, %p49
      %p51 = scmp.ne.s32.totalorder %s40, %s43
      %p52 = scmp.eq.s32.totalorder %s21, 31
      %p53 = por %p51, %p52
      %p54 = scmp.ne.s32.totalorder %s43, %s44
      %p55 = scmp.eq.s32.totalorder %s21, 0
      %p56 = por %p54, %p55
      %p57 = scmp.ne.s32.totalorder %s43, %s44
      %p58 = scmp.eq.s32.totalorder %s22, 31
      %p59 = por %p57, %p58
      %p61 = scmp.ne.s32.totalorder %s44, %s60
      %p62 = scmp.eq.s32.totalorder %s22, 0
      %p63 = por %p61, %p62
      %s64 = sadd.s32 %s24, 1
      %s65 = sadd.s32 %s31, 1
      %s66 = ssub.s32 %s23, %s35
      %s67 = ssub.s32 %s64, %s65
      %s68 = sor.u32 %s66, %s67
      %p69 = scmp.eq.s32.totalorder %s68, 0
      %s71 = sadd.s32 %s70, 1
      %s72 = scalar_select %p69, %s70, %s71
      %p75 = pneg %p69
      %p76 = scmp.eq.s32.totalorder %s16, 31
      %p77 = por %p75, %p76
      %p78 = scmp.ne.s32.totalorder %s70, %s73
      %p79 = scmp.eq.s32.totalorder %s16, 0
      %p80 = por %p78, %p79
      %p81 = scmp.ne.s32.totalorder %s70, %s73
      %p82 = scmp.eq.s32.totalorder %s21, 31
      %p83 = por %p81, %p82
      %p84 = scmp.ne.s32.totalorder %s73, %s74
      %p85 = scmp.eq.s32.totalorder %s21, 0
      %p86 = por %p84, %p85
      %p87 = scmp.ne.s32.totalorder %s73, %s74
      %p88 = scmp.eq.s32.totalorder %s22, 31
      %p89 = por %p87, %p88
      %p91 = scmp.ne.s32.totalorder %s74, %s90
      %p92 = scmp.eq.s32.totalorder %s22, 0
      %p93 = por %p91, %p92
      %s94 = sadd.s32 %s24, 2
      %s95 = sadd.s32 %s31, 2
      %s96 = ssub.s32 %s23, %s35
      %s97 = ssub.s32 %s94, %s95
      %s98 = sor.u32 %s96, %s97
      %p99 = scmp.eq.s32.totalorder %s98, 0
      %s101 = sadd.s32 %s100, 1
      %s102 = scalar_select %p99, %s100, %s101
      %p105 = pneg %p99
      %p106 = scmp.eq.s32.totalorder %s16, 31
      %p107 = por %p105, %p106
      %p108 = scmp.ne.s32.totalorder %s100, %s103
      %p109 = scmp.eq.s32.totalorder %s16, 0
      %p110 = por %p108, %p109
      %p111 = scmp.ne.s32.totalorder %s100, %s103
      %p112 = scmp.eq.s32.totalorder %s21, 31
      %p113 = por %p111, %p112
      %p114 = scmp.ne.s32.totalorder %s103, %s104
      %p115 = scmp.eq.s32.totalorder %s21, 0
      %p116 = por %p114, %p115
      %p117 = scmp.ne.s32.totalorder %s103, %s104
      %p118 = scmp.eq.s32.totalorder %s22, 31
      %p119 = por %p117, %p118
      %p121 = scmp.ne.s32.totalorder %s104, %s120
      %p122 = scmp.eq.s32.totalorder %s22, 0
      %p123 = por %p121, %p122
      %s125 = sadd.s32 %s124, 1
      %p128 = scmp.eq.s32.totalorder %s16, 31
      %p129 = scmp.ne.s32.totalorder %s124, %s126
      %p130 = scmp.eq.s32.totalorder %s16, 0
      %p131 = por %p129, %p130
      %p132 = scmp.ne.s32.totalorder %s124, %s126
      %p133 = scmp.eq.s32.totalorder %s21, 31
      %p134 = por %p132, %p133
      %p135 = scmp.ne.s32.totalorder %s126, %s127
      %p136 = scmp.eq.s32.totalorder %s21, 0
      %p137 = por %p135, %p136
      %p138 = scmp.ne.s32.totalorder %s126, %s127
      %p139 = scmp.eq.s32.totalorder %s22, 31
      %p140 = por %p138, %p139
      %p142 = scmp.ne.s32.totalorder %s127, %s141
      %p143 = scmp.eq.s32.totalorder %s22, 0
      %p144 = por %p142, %p143
      %s146 = sadd.s32 %s145, 1
      %p149 = scmp.eq.s32.totalorder %s16, 31
      %p150 = scmp.ne.s32.totalorder %s145, %s147
      %p151 = scmp.eq.s32.totalorder %s16, 0
      %p152 = por %p150, %p151
      %p153 = scmp.ne.s32.totalorder %s145, %s147
      %p154 = scmp.eq.s32.totalorder %s21, 31
      %p155 = por %p153, %p154
      %p156 = scmp.ne.s32.totalorder %s147, %s148
      %p157 = scmp.eq.s32.totalorder %s21, 0
      %p158 = por %p156, %p157
      %p159 = scmp.ne.s32.totalorder %s147, %s148
      %p160 = scmp.eq.s32.totalorder %s22, 31
      %p161 = por %p159, %p160
      %p163 = scmp.ne.s32.totalorder %s148, %s162
      %p164 = scmp.eq.s32.totalorder %s22, 0
      %p165 = por %p163, %p164
      %s166 = ssub.s32 %s23, %s35
      %s167 = ssub.s32 %s24, %s31
      %s168 = sor.u32 %s166, %s167
      %p169 = scmp.eq.s32.totalorder %s168, 0
      %s171 = sadd.s32 %s170, 1
      %s172 = scalar_select %p169, %s170, %s171
      %p175 = pneg %p169
      %p176 = scmp.eq.s32.totalorder %s16, 31
      %p177 = por %p175, %p176
      %p178 = scmp.ne.s32.totalorder %s170, %s173
      %p179 = scmp.eq.s32.totalorder %s16, 0
      %p180 = por %p178, %p179
      %p181 = scmp.ne.s32.totalorder %s170, %s173
      %p182 = scmp.eq.s32.totalorder %s21, 31
      %p183 = por %p181, %p182
      %p184 = scmp.ne.s32.totalorder %s173, %s174
      %p185 = scmp.eq.s32.totalorder %s21, 0
      %p186 = por %p184, %p185
      %p187 = scmp.ne.s32.totalorder %s173, %s174
      %p188 = scmp.eq.s32.totalorder %s22, 31
      %p189 = por %p187, %p188
      %p191 = scmp.ne.s32.totalorder %s174, %s190
      %p192 = scmp.eq.s32.totalorder %s22, 0
      %p193 = por %p191, %p192
      %s194 = ssub.s32 %s23, %s35
      %p195 = scmp.eq.s32.totalorder %s194, 0
      %s197 = sadd.s32 %s196, 1
      %s198 = scalar_select %p195, %s196, %s197
      %p201 = pneg %p195
      %p202 = scmp.eq.s32.totalorder %s16, 31
      %p203 = por %p201, %p202
      %p204 = scmp.ne.s32.totalorder %s196, %s199
      %p205 = scmp.eq.s32.totalorder %s16, 0
      %p206 = por %p204, %p205
      %p207 = scmp.ne.s32.totalorder %s196, %s199
      %p208 = scmp.eq.s32.totalorder %s21, 31
      %p209 = por %p207, %p208
      %p210 = scmp.ne.s32.totalorder %s199, %s200
      %p211 = scmp.eq.s32.totalorder %s21, 0
      %p212 = por %p210, %p211
      %p213 = scmp.ne.s32.totalorder %s199, %s200
      %p214 = scmp.eq.s32.totalorder %s22, 31
      %p215 = por %p213, %p214
      %p217 = scmp.ne.s32.totalorder %s200, %s216
      %p218 = scmp.eq.s32.totalorder %s22, 0
      %p219 = por %p217, %p218
      %p220 = scmp.le.s32.totalorder 1, %s16
      %p221 = scmp.lt.s32.totalorder %s16, 33
      %p222 = pnand %p220, %p221
      %p223 = pneg %p222
      // Predicated region
      $region9: #{tpu_custom_call.1} parent=5 // pred_check
        _
      $region10: #{tpu_custom_call.1} parent=5 // pred_check_branch
        %225 = sbr.rel (%p222) target = $region12
      $region11: #{tpu_custom_call.1} parent=5 // pred_region
        %s226 = ssub.s32 %s16, 1
        // Predicated region
        $region13: #{tpu_custom_call.1} parent=11 // pred_check
          %p227 = pneg %p137
        $region14: #{tpu_custom_call.1} parent=11 // pred_check_branch
          %229 = sbr.rel (%p227) target = $region16
        $region15: #{tpu_custom_call.1} parent=11 // pred_region
          _
        $region16: #{tpu_custom_call.1} parent=11 // pred_fallthru
          _
        // Predicated region
        $region17: #{tpu_custom_call.1} parent=11 // pred_check
          %p230 = pneg %p158
        $region18: #{tpu_custom_call.1} parent=11 // pred_check_branch
          %232 = sbr.rel (%p230) target = $region20
        $region19: #{tpu_custom_call.1} parent=11 // pred_region
          _
        $region20: #{tpu_custom_call.1} parent=11 // pred_fallthru
          _
      $region12: #{tpu_custom_call.1} parent=5 // pred_fallthru
        _
      %p233 = scmp.lt.s32.totalorder %s16, 32
      // Predicated region
      $region21: #{tpu_custom_call.1} parent=5 // pred_check
        %p234 = pneg %p233
      $region22: #{tpu_custom_call.1} parent=5 // pred_check_branch
        %236 = sbr.rel (%p234) target = $region24
      $region23: #{tpu_custom_call.1} parent=5 // pred_region
        // Predicated region
        $region25: #{tpu_custom_call.1} parent=23 // pred_check
          %p237 = pneg %p50
        $region26: #{tpu_custom_call.1} parent=23 // pred_check_branch
          %239 = sbr.rel (%p237) target = $region28
        $region27: #{tpu_custom_call.1} parent=23 // pred_region
          %p240 = scmp.lt.s32.totalorder %s23, 1
          %s241 = scalar_select %p240, %s23, 1
          %p242 = scmp.lt.s32.totalorder %s24, 17
          %s243 = scalar_select %p242, %s24, 17
          %s244 = smul.addr %s243, 3
          %s245 = smul.addr %s241, 54
          %s246 = sadd.s32 %s244, %s245
          %s247 = smul.addr %s246, 4
          %s248 = scalar_lea.vmem %s0, %s247
        $region28: #{tpu_custom_call.1} parent=23 // pred_fallthru
          _
        // Predicated region
        $region29: #{tpu_custom_call.1} parent=23 // pred_check
          %p249 = pneg %p80
        $region30: #{tpu_custom_call.1} parent=23 // pred_check_branch
          %251 = sbr.rel (%p249) target = $region32
        $region31: #{tpu_custom_call.1} parent=23 // pred_region
          %s252 = sadd.s32 %s24, 1
          %p253 = scmp.lt.s32.totalorder %s23, 1
          %s254 = scalar_select %p253, %s23, 1
          %p255 = scmp.lt.s32.totalorder %s252, 17
          %s256 = scalar_select %p255, %s252, 17
          %s257 = smul.addr %s256, 3
          %s258 = smul.addr %s254, 54
          %s259 = sadd.s32 %s257, %s258
          %s260 = smul.addr %s259, 4
          %s261 = scalar_lea.vmem %s1, %s260
          %s262 = sadd.s32 %s24, 1
        $region32: #{tpu_custom_call.1} parent=23 // pred_fallthru
          _
        // Predicated region
        $region33: #{tpu_custom_call.1} parent=23 // pred_check
          %p263 = pneg %p110
        $region34: #{tpu_custom_call.1} parent=23 // pred_check_branch
          %265 = sbr.rel (%p263) target = $region36
        $region35: #{tpu_custom_call.1} parent=23 // pred_region
          %s266 = sadd.s32 %s24, 2
          %p267 = scmp.lt.s32.totalorder %s23, 1
          %s268 = scalar_select %p267, %s23, 1
          %p269 = scmp.lt.s32.totalorder %s266, 17
          %s270 = scalar_select %p269, %s266, 17
          %s271 = smul.addr %s270, 3
          %s272 = smul.addr %s268, 54
          %s273 = sadd.s32 %s271, %s272
          %s274 = smul.addr %s273, 4
          %s275 = scalar_lea.vmem %s2, %s274
          %s276 = sadd.s32 %s24, 2
        $region36: #{tpu_custom_call.1} parent=23 // pred_fallthru
          _
      $region24: #{tpu_custom_call.1} parent=5 // pred_fallthru
        _
      %p277 = scmp.le.s32.totalorder 1, %s16
      %p278 = scmp.lt.s32.totalorder %s16, 33
      %p279 = pnand %p277, %p278
      %p280 = pneg %p279
      // Predicated region
      $region37: #{tpu_custom_call.1} parent=5 // pred_check
        _
      $region38: #{tpu_custom_call.1} parent=5 // pred_check_branch
        %282 = sbr.rel (%p279) target = $region40
      $region39: #{tpu_custom_call.1} parent=5 // pred_region
        %s283 = ssub.s32 %s16, 1
        %p284 = scmp.lt.s32.totalorder %s25, 1
        %s285 = scalar_select %p284, %s25, 1
        %p286 = scmp.lt.s32.totalorder %s26, 17
        %s287 = scalar_select %p286, %s26, 17
        %s288 = smul.addr %s287, 3
        %s289 = smul.addr %s285, 54
        %s290 = sadd.s32 %s288, %s289
        %s291 = smul.addr %s290, 4
        %s292 = scalar_lea.vmem %s0, %s291
        %p293 = pneg %p56
        %p294 = pneg %p53
        %s295 = sadd.s32 %s26, 1
        %p296 = scmp.lt.s32.totalorder %s25, 1
        %s297 = scalar_select %p296, %s25, 1
        %p298 = scmp.lt.s32.totalorder %s295, 17
        %s299 = scalar_select %p298, %s295, 17
        %s300 = smul.addr %s299, 3
        %s301 = smul.addr %s297, 54
        %s302 = sadd.s32 %s300, %s301
        %s303 = smul.addr %s302, 4
        %s304 = scalar_lea.vmem %s1, %s303
        %p305 = pneg %p86
        %p306 = pneg %p83
        %s307 = sadd.s32 %s26, 2
        %p308 = scmp.lt.s32.totalorder %s25, 1
        %s309 = scalar_select %p308, %s25, 1
        %p310 = scmp.lt.s32.totalorder %s307, 17
        %s311 = scalar_select %p310, %s307, 17
        %s312 = smul.addr %s311, 3
        %s313 = smul.addr %s309, 54
        %s314 = sadd.s32 %s312, %s313
        %s315 = smul.addr %s314, 4
        %s316 = scalar_lea.vmem %s2, %s315
        %p317 = pneg %p116
        %p318 = pneg %p113
        %p319 = pneg %p137
        %p320 = pneg %p134
        %p321 = pneg %p158
        %p322 = pneg %p155
        %p323 = pneg %p186
        %p324 = pneg %p183
        %p325 = scmp.lt.s32.totalorder %s25, 1
        %s326 = scalar_select %p325, %s25, 1
        %p327 = scmp.lt.s32.totalorder %s26, 15
        %s328 = scalar_select %p327, %s26, 15
        %s329 = smul.addr %s328, 2
        %s330 = smul.addr %s326, 32
        %s331 = sadd.s32 %s329, %s330
        %s332 = smul.addr %s331, 4
        %s333 = scalar_lea.vmem %s5, %s332
        %p334 = pneg %p212
        %p335 = pneg %p209
        %s336 = sand.u32 %s199, 1
        %s337 = scalar_lea.sflag [#allocation3], %s336
        %s338 = sand.u32 %s199, 1
        %s339 = scalar_lea.vmem [#allocation2], %s338
        %p340 = scmp.lt.s32.totalorder %s25, 1
        %s341 = scalar_select %p340, %s25, 1
        %p342 = scmp.lt.s32.totalorder %s26, 17
        %s343 = scalar_select %p342, %s26, 17
        %s344 = smul.addr %s343, 3
        %s345 = smul.addr %s341, 54
        %s346 = sadd.s32 %s344, %s345
        %s347 = smul.addr %s346, 4
        %s348 = scalar_lea.vmem %s0, %s347
        %s349 = sadd.s32 %s26, 1
        %p350 = scmp.lt.s32.totalorder %s25, 1
        %s351 = scalar_select %p350, %s25, 1
        %p352 = scmp.lt.s32.totalorder %s349, 17
        %s353 = scalar_select %p352, %s349, 17
        %s354 = smul.addr %s353, 3
        %s355 = smul.addr %s351, 54
        %s356 = sadd.s32 %s354, %s355
        %s357 = smul.addr %s356, 4
        %s358 = scalar_lea.vmem %s1, %s357
        %s359 = sadd.s32 %s26, 1
        %s360 = sadd.s32 %s26, 2
        %p361 = scmp.lt.s32.totalorder %s25, 1
        %s362 = scalar_select %p361, %s25, 1
        %p363 = scmp.lt.s32.totalorder %s360, 17
        %s364 = scalar_select %p363, %s360, 17
        %s365 = smul.addr %s364, 3
        %s366 = smul.addr %s362, 54
        %s367 = sadd.s32 %s365, %s366
        %s368 = smul.addr %s367, 4
        %s369 = scalar_lea.vmem %s2, %s368
        %s370 = sadd.s32 %s26, 2
        %p371 = scmp.lt.s32.totalorder %s25, 1
        %s372 = scalar_select %p371, %s25, 1
        %p373 = scmp.lt.s32.totalorder %s26, 15
        %s374 = scalar_select %p373, %s26, 15
        %s375 = smul.addr %s374, 2
        %s376 = smul.addr %s372, 32
        %s377 = sadd.s32 %s375, %s376
        %s378 = smul.addr %s377, 4
        %s379 = scalar_lea.vmem %s5, %s378
        %v381 = vld [vmem:[%s348] sm:$0xf]
        %v382 = vld [vmem:[%s348 + $0x4] sm:$0xf]
        %v383 = vld [vmem:[%s348 + $0x8] sm:$0x1]
        %v384 = vld [vmem:[%s358] sm:$0xf]
        %v385 = vld [vmem:[%s358 + $0x4] sm:$0xf]
        %v386 = vld [vmem:[%s358 + $0x8] sm:$0x1]
        %v387 = vld [vmem:[%s369] sm:$0xf]
        %v388 = vld [vmem:[%s369 + $0x4] sm:$0xf]
        %v389 = vld [vmem:[%s369 + $0x8] sm:$0x1]
        %v390 = vld [vmem:[%s3] sm:$0x3]
        %s391 = scalar_lea.vmem %s3, 2
        %v392 = vld [vmem:[%s391] sm:$0x3]
        %v396 = vunpack.c.l.b16 %v381
        %v397 = vunpack.c.l.b16 %v382
        %v398 = vunpack.c.l.b16 %v383
        %v399 = vpack.c.b16 %v397, %v396
        %v400 = vpack.c.b16 %v398, %v398
        %vm401 = vsmask.f32 7424
        %v403 = vshrl.u32 %v399, 16
        %v405 = vshll.u32 %v399, 16
        %v407 = vrot.slane %v405, 1
        %v408 = vor.u32 %v403, %v407
        %v410 = vshll.u32 %v400, 16
        %v412 = vrot.slane %v410, 1
        %v413 = vsel %vm401, %v408, %v412
        %vm414 = vcmask 31744
        %v416 = vsel %vm414, %v413, 0
        %vm418 = vcmask 1041408
        %v420 = vsel %vm418, %v392, 0
        %422 = vmatprep.subr.bf16.mxu0 0
        %423 = vmatpush1.bf16.msra.mxu0 0
        %424 = vmatprep.subr.bf16.mxu0 0
        %425 = vmatpush1.bf16.msra.mxu0 0
        %426 = vmatprep.subr.bf16.mxu0 0
        %427 = vmatpush1.bf16.msra.mxu0 0
        %428 = vmatprep.subr.bf16.mxu0 0
        %429 = vmatpush1.bf16.msra.mxu0 0
        %430 = vmatprep.subr.bf16.mxu0 0
        %431 = vmatpush1.bf16.msra.mxu0 0
        %432 = vmatprep.subr.bf16.mxu0 0
        %433 = vmatpush1.bf16.msra.mxu0 0
        %434 = vmatprep.subr.bf16.mxu0 0
        %435 = vmatpush1.bf16.msra.mxu0 0
        %436 = vmatprep.subr.bf16.mxu0 0
        %437 = vmatpush1.bf16.msra.mxu0 %v420
        %438 = vmatprep.subr.bf16.mxu0 0
        %439 = vmatpush2.bf16.msra.mxu0 0
        %440 = vmatprep.subr.bf16.mxu0 0
        %441 = vmatpush2.bf16.msra.mxu0 0
        %442 = vmatprep.subr.bf16.mxu0 0
        %443 = vmatpush2.bf16.msra.mxu0 0
        %444 = vmatprep.subr.bf16.mxu0 0
        %445 = vmatpush2.bf16.msra.mxu0 0
        %446 = vmatprep.subr.bf16.mxu0 0
        %447 = vmatpush2.bf16.msra.mxu0 0
        %448 = vmatprep.subr.bf16.mxu0 0
        %449 = vmatpush2.bf16.msra.mxu0 0
        %450 = vmatprep.subr.bf16.mxu0 0
        %451 = vmatpush2.bf16.msra.mxu0 0
        %452 = vmatprep.subr.bf16.mxu0 0
        %453 = vmatpush2.bf16.msra.mxu0 0
        %454 = vmatprep.mubr.bf16.mxu0 0
        %455 = vmatmul.mubr.bf16.gmra.mxu0 %v416
        %v456 = vpop.f32.mrf.mxu0
        %v457 = vadd.f32 0.0, %v456
        %v458 = vpop.f32.mrf.mxu0
        %v459 = vpop.f32.mrf.mxu0
        %v460 = vadd.f32 0.0, %v459
        %v461 = vpop.f32.mrf.mxu0
        %462 = vdwg.mxu0
        %v463 = vsel %vm414, %v399, 0
        %v466 = vsel %vm418, %v390, 0
        %468 = vmatprep.subr.bf16.mxu0 0
        %469 = vmatpush1.bf16.msra.mxu0 0
        %470 = vmatprep.subr.bf16.mxu0 0
        %471 = vmatpush1.bf16.msra.mxu0 0
        %472 = vmatprep.subr.bf16.mxu0 0
        %473 = vmatpush1.bf16.msra.mxu0 0
        %474 = vmatprep.subr.bf16.mxu0 0
        %475 = vmatpush1.bf16.msra.mxu0 0
        %476 = vmatprep.subr.bf16.mxu0 0
        %477 = vmatpush1.bf16.msra.mxu0 0
        %478 = vmatprep.subr.bf16.mxu0 0
        %479 = vmatpush1.bf16.msra.mxu0 0
        %480 = vmatprep.subr.bf16.mxu0 0
        %481 = vmatpush1.bf16.msra.mxu0 0
        %482 = vmatprep.subr.bf16.mxu0 0
        %483 = vmatpush1.bf16.msra.mxu0 %v466
        %484 = vmatprep.subr.bf16.mxu0 0
        %485 = vmatpush2.bf16.msra.mxu0 0
        %486 = vmatprep.subr.bf16.mxu0 0
        %487 = vmatpush2.bf16.msra.mxu0 0
        %488 = vmatprep.subr.bf16.mxu0 0
        %489 = vmatpush2.bf16.msra.mxu0 0
        %490 = vmatprep.subr.bf16.mxu0 0
        %491 = vmatpush2.bf16.msra.mxu0 0
        %492 = vmatprep.subr.bf16.mxu0 0
        %493 = vmatpush2.bf16.msra.mxu0 0
        %494 = vmatprep.subr.bf16.mxu0 0
        %495 = vmatpush2.bf16.msra.mxu0 0
        %496 = vmatprep.subr.bf16.mxu0 0
        %497 = vmatpush2.bf16.msra.mxu0 0
        %498 = vmatprep.subr.bf16.mxu0 0
        %499 = vmatpush2.bf16.msra.mxu0 0
        %500 = vmatprep.mubr.bf16.mxu0 0
        %501 = vmatmul.mubr.bf16.gmra.mxu0 %v463
        %v502 = vpop.f32.mrf.mxu0
        %v503 = vadd.f32 %v457, %v502
        %v504 = vpop.f32.mrf.mxu0
        %v505 = vpop.f32.mrf.mxu0
        %v506 = vadd.f32 %v460, %v505
        %v507 = vpop.f32.mrf.mxu0
        %508 = vdwg.mxu0
        %s509 = scalar_lea.vmem %s3, 4
        %v510 = vld [vmem:[%s509] sm:$0x3]
        %vm511 = vcmask 1046528
        %v512 = vrot.slane %v399, 1
        %v513 = vrot.slane %v400, 1
        %v514 = vsel %vm511, %v512, %v513
        %v516 = vsel %vm414, %v514, 0
        %v519 = vsel %vm418, %v510, 0
        %521 = vmatprep.subr.bf16.mxu0 0
        %522 = vmatpush1.bf16.msra.mxu0 0
        %523 = vmatprep.subr.bf16.mxu0 0
        %524 = vmatpush1.bf16.msra.mxu0 0
        %525 = vmatprep.subr.bf16.mxu0 0
        %526 = vmatpush1.bf16.msra.mxu0 0
        %527 = vmatprep.subr.bf16.mxu0 0
        %528 = vmatpush1.bf16.msra.mxu0 0
        %529 = vmatprep.subr.bf16.mxu0 0
        %530 = vmatpush1.bf16.msra.mxu0 0
        %531 = vmatprep.subr.bf16.mxu0 0
        %532 = vmatpush1.bf16.msra.mxu0 0
        %533 = vmatprep.subr.bf16.mxu0 0
        %534 = vmatpush1.bf16.msra.mxu0 0
        %535 = vmatprep.subr.bf16.mxu0 0
        %536 = vmatpush1.bf16.msra.mxu0 %v519
        %537 = vmatprep.subr.bf16.mxu0 0
        %538 = vmatpush2.bf16.msra.mxu0 0
        %539 = vmatprep.subr.bf16.mxu0 0
        %540 = vmatpush2.bf16.msra.mxu0 0
        %541 = vmatprep.subr.bf16.mxu0 0
        %542 = vmatpush2.bf16.msra.mxu0 0
        %543 = vmatprep.subr.bf16.mxu0 0
        %544 = vmatpush2.bf16.msra.mxu0 0
        %545 = vmatprep.subr.bf16.mxu0 0
        %546 = vmatpush2.bf16.msra.mxu0 0
        %547 = vmatprep.subr.bf16.mxu0 0
        %548 = vmatpush2.bf16.msra.mxu0 0
        %549 = vmatprep.subr.bf16.mxu0 0
        %550 = vmatpush2.bf16.msra.mxu0 0
        %551 = vmatprep.subr.bf16.mxu0 0
        %552 = vmatpush2.bf16.msra.mxu0 0
        %553 = vmatprep.mubr.bf16.mxu0 0
        %554 = vmatmul.mubr.bf16.gmra.mxu0 %v516
        %v555 = vpop.f32.mrf.mxu0
        %v556 = vadd.f32 0.0, %v555
        %v557 = vpop.f32.mrf.mxu0
        %v558 = vpop.f32.mrf.mxu0
        %v559 = vadd.f32 0.0, %v558
        %v560 = vpop.f32.mrf.mxu0
        %561 = vdwg.mxu0
        %v562 = vadd.f32 %v503, %v556
        %v563 = vadd.f32 %v506, %v559
        %s564 = scalar_lea.vmem %s3, 6
        %v565 = vld [vmem:[%s564] sm:$0x3]
        %v568 = vunpack.c.l.b16 %v384
        %v569 = vunpack.c.l.b16 %v385
        %v570 = vpack.c.b16 %v569, %v568
        %v572 = vsel %vm414, %v570, 0
        %v575 = vsel %vm418, %v565, 0
        %577 = vmatprep.subr.bf16.mxu0 0
        %578 = vmatpush1.bf16.msra.mxu0 0
        %579 = vmatprep.subr.bf16.mxu0 0
        %580 = vmatpush1.bf16.msra.mxu0 0
        %581 = vmatprep.subr.bf16.mxu0 0
        %582 = vmatpush1.bf16.msra.mxu0 0
        %583 = vmatprep.subr.bf16.mxu0 0
        %584 = vmatpush1.bf16.msra.mxu0 0
        %585 = vmatprep.subr.bf16.mxu0 0
        %586 = vmatpush1.bf16.msra.mxu0 0
        %587 = vmatprep.subr.bf16.mxu0 0
        %588 = vmatpush1.bf16.msra.mxu0 0
        %589 = vmatprep.subr.bf16.mxu0 0
        %590 = vmatpush1.bf16.msra.mxu0 0
        %591 = vmatprep.subr.bf16.mxu0 0
        %592 = vmatpush1.bf16.msra.mxu0 %v575
        %593 = vmatprep.subr.bf16.mxu0 0
        %594 = vmatpush2.bf16.msra.mxu0 0
        %595 = vmatprep.subr.bf16.mxu0 0
        %596 = vmatpush2.bf16.msra.mxu0 0
        %597 = vmatprep.subr.bf16.mxu0 0
        %598 = vmatpush2.bf16.msra.mxu0 0
        %599 = vmatprep.subr.bf16.mxu0 0
        %600 = vmatpush2.bf16.msra.mxu0 0
        %601 = vmatprep.subr.bf16.mxu0 0
        %602 = vmatpush2.bf16.msra.mxu0 0
        %603 = vmatprep.subr.bf16.mxu0 0
        %604 = vmatpush2.bf16.msra.mxu0 0
        %605 = vmatprep.subr.bf16.mxu0 0
        %606 = vmatpush2.bf16.msra.mxu0 0
        %607 = vmatprep.subr.bf16.mxu0 0
        %608 = vmatpush2.bf16.msra.mxu0 0
        %609 = vmatprep.mubr.bf16.mxu0 0
        %610 = vmatmul.mubr.bf16.gmra.mxu0 %v572
        %v611 = vpop.f32.mrf.mxu0
        %v612 = vadd.f32 0.0, %v611
        %v613 = vpop.f32.mrf.mxu0
        %v614 = vpop.f32.mrf.mxu0
        %v615 = vadd.f32 0.0, %v614
        %v616 = vpop.f32.mrf.mxu0
        %617 = vdwg.mxu0
        %v618 = vadd.f32 %v562, %v612
        %v619 = vadd.f32 %v563, %v615
        %s620 = scalar_lea.vmem %s3, 8
        %v621 = vld [vmem:[%s620] sm:$0x3]
        %v623 = vunpack.c.l.b16 %v386
        %v624 = vpack.c.b16 %v623, %v623
        %v625 = vshrl.u32 %v570, 16
        %v627 = vshll.u32 %v570, 16
        %v629 = vrot.slane %v627, 1
        %v630 = vor.u32 %v625, %v629
        %v632 = vshll.u32 %v624, 16
        %v634 = vrot.slane %v632, 1
        %v635 = vsel %vm401, %v630, %v634
        %v637 = vsel %vm414, %v635, 0
        %v640 = vsel %vm418, %v621, 0
        %642 = vmatprep.subr.bf16.mxu0 0
        %643 = vmatpush1.bf16.msra.mxu0 0
        %644 = vmatprep.subr.bf16.mxu0 0
        %645 = vmatpush1.bf16.msra.mxu0 0
        %646 = vmatprep.subr.bf16.mxu0 0
        %647 = vmatpush1.bf16.msra.mxu0 0
        %648 = vmatprep.subr.bf16.mxu0 0
        %649 = vmatpush1.bf16.msra.mxu0 0
        %650 = vmatprep.subr.bf16.mxu0 0
        %651 = vmatpush1.bf16.msra.mxu0 0
        %652 = vmatprep.subr.bf16.mxu0 0
        %653 = vmatpush1.bf16.msra.mxu0 0
        %654 = vmatprep.subr.bf16.mxu0 0
        %655 = vmatpush1.bf16.msra.mxu0 0
        %656 = vmatprep.subr.bf16.mxu0 0
        %657 = vmatpush1.bf16.msra.mxu0 %v640
        %658 = vmatprep.subr.bf16.mxu0 0
        %659 = vmatpush2.bf16.msra.mxu0 0
        %660 = vmatprep.subr.bf16.mxu0 0
        %661 = vmatpush2.bf16.msra.mxu0 0
        %662 = vmatprep.subr.bf16.mxu0 0
        %663 = vmatpush2.bf16.msra.mxu0 0
        %664 = vmatprep.subr.bf16.mxu0 0
        %665 = vmatpush2.bf16.msra.mxu0 0
        %666 = vmatprep.subr.bf16.mxu0 0
        %667 = vmatpush2.bf16.msra.mxu0 0
        %668 = vmatprep.subr.bf16.mxu0 0
        %669 = vmatpush2.bf16.msra.mxu0 0
        %670 = vmatprep.subr.bf16.mxu0 0
        %671 = vmatpush2.bf16.msra.mxu0 0
        %672 = vmatprep.subr.bf16.mxu0 0
        %673 = vmatpush2.bf16.msra.mxu0 0
        %674 = vmatprep.mubr.bf16.mxu0 0
        %675 = vmatmul.mubr.bf16.gmra.mxu0 %v637
        %v676 = vpop.f32.mrf.mxu0
        %v677 = vadd.f32 0.0, %v676
        %v678 = vpop.f32.mrf.mxu0
        %v679 = vpop.f32.mrf.mxu0
        %v680 = vadd.f32 0.0, %v679
        %v681 = vpop.f32.mrf.mxu0
        %682 = vdwg.mxu0
        %v683 = vadd.f32 %v618, %v677
        %v684 = vadd.f32 %v619, %v680
        %s685 = scalar_lea.vmem %s3, 10
        %v686 = vld [vmem:[%s685] sm:$0x3]
        %v687 = vrot.slane %v570, 1
        %v688 = vrot.slane %v624, 1
        %v689 = vsel %vm511, %v687, %v688
        %v691 = vsel %vm414, %v689, 0
        %v694 = vsel %vm418, %v686, 0
        %696 = vmatprep.subr.bf16.mxu0 0
        %697 = vmatpush1.bf16.msra.mxu0 0
        %698 = vmatprep.subr.bf16.mxu0 0
        %699 = vmatpush1.bf16.msra.mxu0 0
        %700 = vmatprep.subr.bf16.mxu0 0
        %701 = vmatpush1.bf16.msra.mxu0 0
        %702 = vmatprep.subr.bf16.mxu0 0
        %703 = vmatpush1.bf16.msra.mxu0 0
        %704 = vmatprep.subr.bf16.mxu0 0
        %705 = vmatpush1.bf16.msra.mxu0 0
        %706 = vmatprep.subr.bf16.mxu0 0
        %707 = vmatpush1.bf16.msra.mxu0 0
        %708 = vmatprep.subr.bf16.mxu0 0
        %709 = vmatpush1.bf16.msra.mxu0 0
        %710 = vmatprep.subr.bf16.mxu0 0
        %711 = vmatpush1.bf16.msra.mxu0 %v694
        %712 = vmatprep.subr.bf16.mxu0 0
        %713 = vmatpush2.bf16.msra.mxu0 0
        %714 = vmatprep.subr.bf16.mxu0 0
        %715 = vmatpush2.bf16.msra.mxu0 0
        %716 = vmatprep.subr.bf16.mxu0 0
        %717 = vmatpush2.bf16.msra.mxu0 0
        %718 = vmatprep.subr.bf16.mxu0 0
        %719 = vmatpush2.bf16.msra.mxu0 0
        %720 = vmatprep.subr.bf16.mxu0 0
        %721 = vmatpush2.bf16.msra.mxu0 0
        %722 = vmatprep.subr.bf16.mxu0 0
        %723 = vmatpush2.bf16.msra.mxu0 0
        %724 = vmatprep.subr.bf16.mxu0 0
        %725 = vmatpush2.bf16.msra.mxu0 0
        %726 = vmatprep.subr.bf16.mxu0 0
        %727 = vmatpush2.bf16.msra.mxu0 0
        %728 = vmatprep.mubr.bf16.mxu0 0
        %729 = vmatmul.mubr.bf16.gmra.mxu0 %v691
        %v730 = vpop.f32.mrf.mxu0
        %v731 = vadd.f32 0.0, %v730
        %v732 = vpop.f32.mrf.mxu0
        %v733 = vpop.f32.mrf.mxu0
        %v734 = vadd.f32 0.0, %v733
        %v735 = vpop.f32.mrf.mxu0
        %736 = vdwg.mxu0
        %v737 = vadd.f32 %v683, %v731
        %v738 = vadd.f32 %v684, %v734
        %s739 = scalar_lea.vmem %s3, 12
        %v740 = vld [vmem:[%s739] sm:$0x3]
        %v743 = vunpack.c.l.b16 %v387
        %v744 = vunpack.c.l.b16 %v388
        %v745 = vpack.c.b16 %v744, %v743
        %v747 = vsel %vm414, %v745, 0
        %v750 = vsel %vm418, %v740, 0
        %752 = vmatprep.subr.bf16.mxu0 0
        %753 = vmatpush1.bf16.msra.mxu0 0
        %754 = vmatprep.subr.bf16.mxu0 0
        %755 = vmatpush1.bf16.msra.mxu0 0
        %756 = vmatprep.subr.bf16.mxu0 0
        %757 = vmatpush1.bf16.msra.mxu0 0
        %758 = vmatprep.subr.bf16.mxu0 0
        %759 = vmatpush1.bf16.msra.mxu0 0
        %760 = vmatprep.subr.bf16.mxu0 0
        %761 = vmatpush1.bf16.msra.mxu0 0
        %762 = vmatprep.subr.bf16.mxu0 0
        %763 = vmatpush1.bf16.msra.mxu0 0
        %764 = vmatprep.subr.bf16.mxu0 0
        %765 = vmatpush1.bf16.msra.mxu0 0
        %766 = vmatprep.subr.bf16.mxu0 0
        %767 = vmatpush1.bf16.msra.mxu0 %v750
        %768 = vmatprep.subr.bf16.mxu0 0
        %769 = vmatpush2.bf16.msra.mxu0 0
        %770 = vmatprep.subr.bf16.mxu0 0
        %771 = vmatpush2.bf16.msra.mxu0 0
        %772 = vmatprep.subr.bf16.mxu0 0
        %773 = vmatpush2.bf16.msra.mxu0 0
        %774 = vmatprep.subr.bf16.mxu0 0
        %775 = vmatpush2.bf16.msra.mxu0 0
        %776 = vmatprep.subr.bf16.mxu0 0
        %777 = vmatpush2.bf16.msra.mxu0 0
        %778 = vmatprep.subr.bf16.mxu0 0
        %779 = vmatpush2.bf16.msra.mxu0 0
        %780 = vmatprep.subr.bf16.mxu0 0
        %781 = vmatpush2.bf16.msra.mxu0 0
        %782 = vmatprep.subr.bf16.mxu0 0
        %783 = vmatpush2.bf16.msra.mxu0 0
        %784 = vmatprep.mubr.bf16.mxu0 0
        %785 = vmatmul.mubr.bf16.gmra.mxu0 %v747
        %v786 = vpop.f32.mrf.mxu0
        %v787 = vadd.f32 0.0, %v786
        %v788 = vpop.f32.mrf.mxu0
        %v789 = vpop.f32.mrf.mxu0
        %v790 = vadd.f32 0.0, %v789
        %v791 = vpop.f32.mrf.mxu0
        %792 = vdwg.mxu0
        %v793 = vadd.f32 %v737, %v787
        %v794 = vadd.f32 %v738, %v790
        %s795 = scalar_lea.vmem %s3, 14
        %v796 = vld [vmem:[%s795] sm:$0x3]
        %v798 = vunpack.c.l.b16 %v389
        %v799 = vpack.c.b16 %v798, %v798
        %v800 = vshrl.u32 %v745, 16
        %v802 = vshll.u32 %v745, 16
        %v804 = vrot.slane %v802, 1
        %v805 = vor.u32 %v800, %v804
        %v807 = vshll.u32 %v799, 16
        %v809 = vrot.slane %v807, 1
        %v810 = vsel %vm401, %v805, %v809
        %v812 = vsel %vm414, %v810, 0
        %v815 = vsel %vm418, %v796, 0
        %817 = vmatprep.subr.bf16.mxu0 0
        %818 = vmatpush1.bf16.msra.mxu0 0
        %819 = vmatprep.subr.bf16.mxu0 0
        %820 = vmatpush1.bf16.msra.mxu0 0
        %821 = vmatprep.subr.bf16.mxu0 0
        %822 = vmatpush1.bf16.msra.mxu0 0
        %823 = vmatprep.subr.bf16.mxu0 0
        %824 = vmatpush1.bf16.msra.mxu0 0
        %825 = vmatprep.subr.bf16.mxu0 0
        %826 = vmatpush1.bf16.msra.mxu0 0
        %827 = vmatprep.subr.bf16.mxu0 0
        %828 = vmatpush1.bf16.msra.mxu0 0
        %829 = vmatprep.subr.bf16.mxu0 0
        %830 = vmatpush1.bf16.msra.mxu0 0
        %831 = vmatprep.subr.bf16.mxu0 0
        %832 = vmatpush1.bf16.msra.mxu0 %v815
        %833 = vmatprep.subr.bf16.mxu0 0
        %834 = vmatpush2.bf16.msra.mxu0 0
        %835 = vmatprep.subr.bf16.mxu0 0
        %836 = vmatpush2.bf16.msra.mxu0 0
        %837 = vmatprep.subr.bf16.mxu0 0
        %838 = vmatpush2.bf16.msra.mxu0 0
        %839 = vmatprep.subr.bf16.mxu0 0
        %840 = vmatpush2.bf16.msra.mxu0 0
        %841 = vmatprep.subr.bf16.mxu0 0
        %842 = vmatpush2.bf16.msra.mxu0 0
        %843 = vmatprep.subr.bf16.mxu0 0
        %844 = vmatpush2.bf16.msra.mxu0 0
        %845 = vmatprep.subr.bf16.mxu0 0
        %846 = vmatpush2.bf16.msra.mxu0 0
        %847 = vmatprep.subr.bf16.mxu0 0
        %848 = vmatpush2.bf16.msra.mxu0 0
        %849 = vmatprep.mubr.bf16.mxu0 0
        %850 = vmatmul.mubr.bf16.gmra.mxu0 %v812
        %v851 = vpop.f32.mrf.mxu0
        %v852 = vadd.f32 0.0, %v851
        %v853 = vpop.f32.mrf.mxu0
        %v854 = vpop.f32.mrf.mxu0
        %v855 = vadd.f32 0.0, %v854
        %v856 = vpop.f32.mrf.mxu0
        %857 = vdwg.mxu0
        %v858 = vadd.f32 %v793, %v852
        %v859 = vadd.f32 %v794, %v855
        %s860 = scalar_lea.vmem %s3, 16
        %v861 = vld [vmem:[%s860] sm:$0x3]
        %v862 = vrot.slane %v745, 1
        %v863 = vrot.slane %v799, 1
        %v864 = vsel %vm511, %v862, %v863
        %v866 = vsel %vm414, %v864, 0
        %v869 = vsel %vm418, %v861, 0
        %871 = vmatprep.subr.bf16.mxu0 0
        %872 = vmatpush1.bf16.msra.mxu0 0
        %873 = vmatprep.subr.bf16.mxu0 0
        %874 = vmatpush1.bf16.msra.mxu0 0
        %875 = vmatprep.subr.bf16.mxu0 0
        %876 = vmatpush1.bf16.msra.mxu0 0
        %877 = vmatprep.subr.bf16.mxu0 0
        %878 = vmatpush1.bf16.msra.mxu0 0
        %879 = vmatprep.subr.bf16.mxu0 0
        %880 = vmatpush1.bf16.msra.mxu0 0
        %881 = vmatprep.subr.bf16.mxu0 0
        %882 = vmatpush1.bf16.msra.mxu0 0
        %883 = vmatprep.subr.bf16.mxu0 0
        %884 = vmatpush1.bf16.msra.mxu0 0
        %885 = vmatprep.subr.bf16.mxu0 0
        %886 = vmatpush1.bf16.msra.mxu0 %v869
        %887 = vmatprep.subr.bf16.mxu0 0
        %888 = vmatpush2.bf16.msra.mxu0 0
        %889 = vmatprep.subr.bf16.mxu0 0
        %890 = vmatpush2.bf16.msra.mxu0 0
        %891 = vmatprep.subr.bf16.mxu0 0
        %892 = vmatpush2.bf16.msra.mxu0 0
        %893 = vmatprep.subr.bf16.mxu0 0
        %894 = vmatpush2.bf16.msra.mxu0 0
        %895 = vmatprep.subr.bf16.mxu0 0
        %896 = vmatpush2.bf16.msra.mxu0 0
        %897 = vmatprep.subr.bf16.mxu0 0
        %898 = vmatpush2.bf16.msra.mxu0 0
        %899 = vmatprep.subr.bf16.mxu0 0
        %900 = vmatpush2.bf16.msra.mxu0 0
        %901 = vmatprep.subr.bf16.mxu0 0
        %902 = vmatpush2.bf16.msra.mxu0 0
        %903 = vmatprep.mubr.bf16.mxu0 0
        %904 = vmatmul.mubr.bf16.gmra.mxu0 %v866
        %v905 = vpop.f32.mrf.mxu0
        %v906 = vadd.f32 0.0, %v905
        %v907 = vpop.f32.mrf.mxu0
        %v908 = vpop.f32.mrf.mxu0
        %v909 = vadd.f32 0.0, %v908
        %v910 = vpop.f32.mrf.mxu0
        %911 = vdwg.mxu0
        %v912 = vadd.f32 %v858, %v906
        %v913 = vadd.f32 %v859, %v909
        %v914 = vld [vmem:[%s4] sm:$0x1]
        %v916 = vlaneseq
        %v917 = vshrl.u32 %v916, 7
        %v918 = vsub.s32 0, %v917
        %v919 = vrot.slane %v914, %v918
        %v921 = vadd.f32 %v912, %v919
        %v922 = vadd.f32 %v913, %v919
        %v923 = vmax.f32 %v921, 0.0
        %v924 = vmax.f32 %v922, 0.0
        %v925 = vpack.c.bf16 %v924, %v923
        %v927 = vunpack.c.l.b16 %v925
        %v928 = vunpack.c.h.b16 %v925
        %v929 = vpack.c.b16 %v927, %v927
        %v930 = vpack.c.b16 %v928, %v928
        %vm933 = vcmask 60416
        %934 = vst.msk [vmem:[%s379] sm:$0xf] %vm933, %v929
        %935 = vst.msk [vmem:[%s379 + $0x4] sm:$0xf] %vm933, %v930
        %v936 = vmul.f32 %v923, %v923
        %v937 = vmul.f32 %v924, %v924
        %vm938 = vcmask 64512
        %v939 = vsel %vm938, %v936, 0.0
        %940 = vadd.xlane.f32.xlu0 %v939
        %v941 = vpop.xlane.xlu0 %940
        %v942 = vsel %vm938, %v937, 0.0
        %943 = vadd.xlane.f32.xlu0 %v942
        %v944 = vpop.xlane.xlu0 %943
        %v945 = vmax.f32 %v941, 1e-24
        %v946 = vmax.f32 %v944, 1e-24
        %v947 = vrsqrt.pop %v945
        %v948 = vrsqrt.pop %v946
        %v949 = vmul.f32 %v923, %v947
        %v950 = vmul.f32 %v924, %v948
        %v951 = vsel %vm938, %v949, -inf
        %v952 = vsel %vm938, %v950, -inf
        %v953 = vmax.f32 %v951, %v952
        %v954 = vrot.slane %v953, 4
        %v955 = vmax.f32 %v953, %v954
        %v956 = vrot.slane %v955, 2
        %v957 = vmax.f32 %v955, %v956
        %v958 = vrot.slane %v957, 1
        %v959 = vmax.f32 %v957, %v958
        %p960 = scmp.eq.s32.totalorder %s26, 0
        // Predicated region
        $region41: #{tpu_custom_call.1} parent=39 // pred_check
          %p961 = pneg %p960
        $region42: #{tpu_custom_call.1} parent=39 // pred_check_branch
          %963 = sbr.rel (%p961) target = $region44
        $region43: #{tpu_custom_call.1} parent=39 // pred_region
          %vm964 = vcmask 57344
          %965 = vst.msk [vmem:[%s339] sm:$0x1] %vm964, %v959
        $region44: #{tpu_custom_call.1} parent=39 // pred_fallthru
          _
        %p966 = scmp.ne.s32.totalorder %s26, 0
        // Predicated region
        $region45: #{tpu_custom_call.1} parent=39 // pred_check
          %p967 = pneg %p966
        $region46: #{tpu_custom_call.1} parent=39 // pred_check_branch
          %969 = sbr.rel (%p967) target = $region48
        $region47: #{tpu_custom_call.1} parent=39 // pred_region
          %v970 = vld [vmem:[%s339] sm:$0x1]
          %v971 = vmax.f32 %v970, %v959
          %vm972 = vcmask 57344
          %973 = vst.msk [vmem:[%s339] sm:$0x1] %vm972, %v971
        $region48: #{tpu_custom_call.1} parent=39 // pred_fallthru
          _
        %p974 = scmp.eq.s32.totalorder %s26, 15
        // Predicated region
        $region49: #{tpu_custom_call.1} parent=39 // pred_check
          %p975 = pneg %p974
        $region50: #{tpu_custom_call.1} parent=39 // pred_check_branch
          %977 = sbr.rel (%p975) target = $region52
        $region51: #{tpu_custom_call.1} parent=39 // pred_region
          %v978 = vld [vmem:[%s339] sm:$0x1]
          %v979 = vmul.f32 %v978, %v978
          %vm980 = vcmask 57344
          %v981 = vsel %vm980, %v979, 0.0
          %982 = vadd.xlane.f32.xlu0 %v981
          %v983 = vpop.xlane.xlu0 %982
          %v984 = vmax.f32 %v983, 1e-24
          %v985 = vrsqrt.pop %v984
          %v986 = vmul.f32 %v978, %v985
          %987 = vst.msk [vmem:[%s339] sm:$0x1] %vm980, %v986
        $region52: #{tpu_custom_call.1} parent=39 // pred_fallthru
          _
        %p988 = scmp.lt.s32.totalorder %s25, 1
        %s989 = scalar_select %p988, %s25, 1
        %p990 = scmp.lt.s32.totalorder %s26, 15
        %s991 = scalar_select %p990, %s26, 15
        %s992 = smul.addr %s991, 2
        %s993 = smul.addr %s989, 32
        %s994 = sadd.s32 %s992, %s993
        %s995 = smul.addr %s994, 4
        %s996 = scalar_lea.vmem %s5, %s995
        %s997 = sand.u32 %s199, 1
        %s998 = scalar_lea.sflag [#allocation3], %s997
        %s999 = sand.u32 %s199, 1
        %s1000 = scalar_lea.vmem [#allocation2], %s999
        // Predicated region
        $region53: #{tpu_custom_call.1} parent=39 // pred_check
          %p1001 = pneg %p183
        $region54: #{tpu_custom_call.1} parent=39 // pred_check_branch
          %1003 = sbr.rel (%p1001) target = $region56
        $region55: #{tpu_custom_call.1} parent=39 // pred_region
          _
        $region56: #{tpu_custom_call.1} parent=39 // pred_fallthru
          _
        // Predicated region
        $region57: #{tpu_custom_call.1} parent=39 // pred_check
          %p1004 = pneg %p209
        $region58: #{tpu_custom_call.1} parent=39 // pred_check_branch
          %1006 = sbr.rel (%p1004) target = $region60
        $region59: #{tpu_custom_call.1} parent=39 // pred_region
          %s1008 = ssub.s32 16, 16
          %1009 = vsyncadd %s998, %s1008
          %s1010 = smul.addr %s25, 16
          %s1011 = scalar_lea.hbm %s6, %s1010
          %s1013 = sshll.u32 %s1000, 4
          %s1014 = int_to_ptr.vmem [resolvable:$true] %s1013
          %1016 = dma.vmem_to_hbm [thread:$0]  %s1014, 16, %s1011, %s998
        $region60: #{tpu_custom_call.1} parent=39 // pred_fallthru
          _
      $region40: #{tpu_custom_call.1} parent=5 // pred_fallthru
        _
      %p1017 = scmp.le.s32.totalorder 2, %s16
      // Predicated region
      $region61: #{tpu_custom_call.1} parent=5 // pred_check
        %p1018 = pneg %p1017
      $region62: #{tpu_custom_call.1} parent=5 // pred_check_branch
        %1020 = sbr.rel (%p1018) target = $region64
      $region63: #{tpu_custom_call.1} parent=5 // pred_region
        %s1021 = ssub.s32 %s16, 2
        // Predicated region
        $region65: #{tpu_custom_call.1} parent=63 // pred_check
          %p1022 = pneg %p189
        $region66: #{tpu_custom_call.1} parent=63 // pred_check_branch
          %1024 = sbr.rel (%p1022) target = $region68
        $region67: #{tpu_custom_call.1} parent=63 // pred_region
          %p1025 = scmp.lt.s32.totalorder %s27, 1
          %s1026 = scalar_select %p1025, %s27, 1
          %p1027 = scmp.lt.s32.totalorder %s28, 15
          %s1028 = scalar_select %p1027, %s28, 15
          %s1029 = smul.addr %s1028, 2
          %s1030 = smul.addr %s1026, 32
          %s1031 = sadd.s32 %s1029, %s1030
          %s1032 = smul.addr %s1031, 4
          %s1033 = scalar_lea.vmem %s5, %s1032
        $region68: #{tpu_custom_call.1} parent=63 // pred_fallthru
          _
        // Predicated region
        $region69: #{tpu_custom_call.1} parent=63 // pred_check
          %p1034 = pneg %p215
        $region70: #{tpu_custom_call.1} parent=63 // pred_check_branch
          %1036 = sbr.rel (%p1034) target = $region72
        $region71: #{tpu_custom_call.1} parent=63 // pred_region
          %s1037 = sand.u32 %s200, 1
          %s1038 = scalar_lea.sflag [#allocation3], %s1037
          %s1039 = sand.u32 %s200, 1
          %s1040 = scalar_lea.vmem [#allocation2], %s1039
          %1041 = dma.done %s1038, 16
        $region72: #{tpu_custom_call.1} parent=63 // pred_fallthru
          _
      $region64: #{tpu_custom_call.1} parent=5 // pred_fallthru
        _
    $region6: #{tpu_custom_call.1} parent=1 // loop_footer
      %s20 = sadd.s32 1, %s16
    $region7: #{tpu_custom_call.1} parent=1 // loop_footer_branch
      %15 = sbr.rel target = $region3
    $region8: #{tpu_custom_call.1} parent=1 // loop_exit
      _
    %1042 = vsyncpa [#allocation3], 1
    %s1043 = scalar_lea.sflag [#allocation3], 1
    %1044 = vsyncpa %s1043, 1

</llo_original>
